<compile_context>
chip_gen: v7x
topology: tpu7x:2x2x1
jax: 0.10.0
libtpu: 0.0.40
codegen_flags: <defaults>
</compile_context>

<pallas_src>
import math

import jax
import jax.numpy as jnp
from jax import lax
from jax.experimental import pallas as pl
from jax.experimental.pallas import tpu as pltpu

BN_EPS = 1e-5
INV_SQRT2 = 1.0 / math.sqrt(2.0)
Y_DTYPE = jnp.bfloat16        # conv-output intermediate dtype (batch stats stay f32-exact)


# ----------------------------------------------------------------------------
# Pass 1: fused stride-2 gather + conv (3 accumulated matmuls) + per-image stats.
# ----------------------------------------------------------------------------
def _conv_stats_kernel(ee_ref, oe_ref, w_ref, y_ref, s1_ref, m2_ref):
    # ee_ref: [3*Cin, (Ho+1)*Wo] bf16  even padded rows, kw-expanded, channel-major
    # oe_ref: [3*Cin,  Ho   *Wo] bf16  odd  padded rows, kw-expanded, channel-major
    # w_ref : [3, Cout, 3*Cin]   bf16  weights grouped by kh (kh, co, kw*Cin + ci)
    # y_ref : [Cout, Ho*Wo]      bf16  channel-major conv output for this image
    # s1_ref: [1, Cout, 1]       f32   per-image channel sum
    # m2_ref: [1, Cout, 1]       f32   per-image centered sum of squares
    _, mp = ee_ref.shape
    _, m = oe_ref.shape
    wo = mp - m                      # (Ho+1)*Wo - Ho*Wo == Wo

    e = ee_ref[...]                  # bf16, stays bf16 for the MXU fast path
    o = oe_ref[...]

    # kh = 0 uses even rows ho', kh = 1 odd rows ho', kh = 2 even rows ho'+1 (lane shift Wo).
    acc = jnp.dot(w_ref[0], e[:, 0:m], preferred_element_type=jnp.float32)
    acc = acc + jnp.dot(w_ref[1], o, preferred_element_type=jnp.float32)
    acc = acc + jnp.dot(w_ref[2], e[:, wo:wo + m], preferred_element_type=jnp.float32)
    # acc: [Cout, Ho*Wo] f32

    # Centered per-tile statistics (combined with Chan's formula in the wrapper):
    # no E[y^2] - mean^2 cancellation even when channel means are large.
    s1 = jnp.sum(acc, axis=1, keepdims=True)                 # [Cout, 1]
    mu = s1 * (1.0 / m)
    d = acc - mu
    m2 = jnp.sum(d * d, axis=1, keepdims=True)               # [Cout, 1]
    s1_ref[...] = s1[None]
    m2_ref[...] = m2[None]

    # Lane-dense store (lanes = Ho*Wo); bf16 intermediate halves y HBM traffic.
    y_ref[...] = acc.astype(y_ref.dtype)


# ----------------------------------------------------------------------------
# Pass 2: folded BatchNorm apply (one FMA per element) + exact erf GELU.
# ----------------------------------------------------------------------------
def _bn_gelu_kernel(y_ref, a_ref, c_ref, o_ref):
    # y_ref: [Cout, TL] bf16 ; a_ref, c_ref: [Cout, 1] f32 (resident) ; o_ref: [Cout, TL] f32
    z = y_ref[...].astype(jnp.float32) * a_ref[...] + c_ref[...]
    o_ref[...] = 0.5 * z * (1.0 + lax.erf(z * INV_SQRT2))


# ----------------------------------------------------------------------------
# Wrapper helpers.
# ----------------------------------------------------------------------------
def _kw_expand(rows, wo):
    """[N, R, W+2, Cin] -> [N, R, Wo, 3*Cin]; lane q = kw*Cin + ci holds column 2*wo' + kw."""
    taps = [rows[:, :, kw:kw + 2 * wo:2, :] for kw in range(3)]
    return jnp.concatenate(taps, axis=-1)


def _pick_lane_tile(total, cap=4096):
    """Largest multiple-of-128 divisor of `total` that is <= cap (or `total` itself)."""
    if total <= cap:
        return total
    t = cap - cap % 128
    while t >= 128:
        if total % t == 0:
            return t
        t -= 128
    return total


@jax.jit
def down_conv(x_nchw, conv_w, conv_b, bn_gamma, bn_beta):
    """x: [N, Cin, H, W] f32; conv_w: [Cout, Cin, 3, 3]; returns [N, Cout, Ho, Wo] f32."""
    del conv_b  # Cancels exactly under training-mode BN (batch-mean subtraction).
    n, cin, h, w = x_nchw.shape
    cout = conv_w.shape[0]
    ho = (h - 1) // 2 + 1
    wo = (w - 1) // 2 + 1
    hw = ho * wo

    # --- Input staging: cast to bf16 *first*, then layout work.  Only a ~1.5x bf16
    #     "kw-expanded" copy is staged; the stride-2 row gather is fused into pass 1. ---
    x_nhwc = jnp.transpose(x_nchw.astype(jnp.bfloat16), (0, 2, 3, 1))
    xp = jnp.pad(x_nhwc, ((0, 0), (1, 1), (1, 1), (0, 0)))            # [N, H+2, W+2, Cin]
    ee = _kw_expand(xp[:, 0:2 * ho + 1:2], wo)                        # [N, Ho+1, Wo, 3Cin]
    oe = _kw_expand(xp[:, 1:2 * ho:2], wo)                            # [N, Ho,   Wo, 3Cin]
    # Channel-major per image so pass 1 never needs an in-kernel transpose or reshape.
    ee_t = jnp.transpose(ee, (0, 3, 1, 2)).reshape(n, 3 * cin, (ho + 1) * wo)
    oe_t = jnp.transpose(oe, (0, 3, 1, 2)).reshape(n, 3 * cin, ho * wo)

    # Weights grouped by kh: w_t[kh, co, kw*Cin + ci] = conv_w[co, ci, kh, kw].
    w_t = jnp.transpose(conv_w, (2, 0, 3, 1)).reshape(3, cout, 3 * cin).astype(jnp.bfloat16)

    # --- Pass 1: grid over images (>= 2 steps for the demo -> both v7x cores busy). ---
    y_t, s1_arr, m2_arr = pl.pallas_call(
        _conv_stats_kernel,
        out_shape=(
            jax.ShapeDtypeStruct((n, cout, hw), Y_DTYPE),
            jax.ShapeDtypeStruct((n, cout, 1), jnp.float32),
            jax.ShapeDtypeStruct((n, cout, 1), jnp.float32),
        ),
        grid=(n,),
        in_specs=[
            pl.BlockSpec((None, 3 * cin, (ho + 1) * wo), lambda i: (i, 0, 0)),
            pl.BlockSpec((None, 3 * cin, ho * wo), lambda i: (i, 0, 0)),
            pl.BlockSpec((3, cout, 3 * cin), lambda i: (0, 0, 0)),    # resident weights
        ],
        out_specs=(
            pl.BlockSpec((None, cout, hw), lambda i: (i, 0, 0)),
            pl.BlockSpec((1, cout, 1), lambda i: (i, 0, 0)),
            pl.BlockSpec((1, cout, 1), lambda i: (i, 0, 0)),
        ),
        compiler_params=pltpu.CompilerParams(dimension_semantics=("parallel",)),
    )(ee_t, oe_t, w_t)

    # --- Finalize training-mode batch statistics (Chan's parallel combine, f32) and fold
    #     BN into one per-channel scale/shift: a = gamma*rsqrt(var+eps), c = beta - mean*a.
    s1 = s1_arr[:, :, 0]                                   # [N, Cout] per-image sums
    m2 = m2_arr[:, :, 0]                                   # [N, Cout] per-image centered SS
    m_tile = float(hw)
    m_total = float(n * hw)
    mean = jnp.sum(s1, axis=0) / m_total
    mu_t = s1 / m_tile
    var = (jnp.sum(m2, axis=0) + m_tile * jnp.sum((mu_t - mean) ** 2, axis=0)) / m_total
    a = bn_gamma.astype(jnp.float32) * lax.rsqrt(var + BN_EPS)
    c = bn_beta.astype(jnp.float32) - mean * a
    a_col = a.reshape(cout, 1)
    c_col = c.reshape(cout, 1)

    # --- Pass 2: normalize + exact erf GELU on the channel-major (lane-dense) layout. ---
    tl = _pick_lane_tile(hw)
    out_t = pl.pallas_call(
        _bn_gelu_kernel,
        out_shape=jax.ShapeDtypeStruct((n, cout, hw), jnp.float32),
        grid=(n, hw // tl),
        in_specs=[
            pl.BlockSpec((None, cout, tl), lambda i, j: (i, 0, j)),
            pl.BlockSpec((cout, 1), lambda i, j: (0, 0)),             # resident scale
            pl.BlockSpec((cout, 1), lambda i, j: (0, 0)),             # resident shift
        ],
        out_specs=pl.BlockSpec((None, cout, tl), lambda i, j: (i, 0, j)),
        compiler_params=pltpu.CompilerParams(dimension_semantics=("parallel", "parallel")),
    )(y_t, a_col, c_col)

    # Channel-major already IS NCHW: the final reshape is free (no output transpose).
    return out_t.reshape(n, cout, ho, wo)


def _reference(x_nchw, conv_w, conv_b, bn_gamma, bn_beta):
    """Pure-f32 JAX reference mirroring PyTorch DownConv.forward (training-mode BN)."""
    y = lax.conv_general_dilated(
        x_nchw, conv_w, window_strides=(2, 2), padding=((1, 1), (1, 1)),
        dimension_numbers=("NCHW", "OIHW", "NCHW"))
    y = y + conv_b.reshape(1, -1, 1, 1)
    mean = jnp.mean(y, axis=(0, 2, 3), keepdims=True)
    var = jnp.mean((y - mean) ** 2, axis=(0, 2, 3), keepdims=True)   # biased var, as in BN
    y_hat = (y - mean) * lax.rsqrt(var + BN_EPS)
    z = bn_gamma.reshape(1, -1, 1, 1) * y_hat + bn_beta.reshape(1, -1, 1, 1)
    return 0.5 * z * (1.0 + lax.erf(z * INV_SQRT2))


if __name__ == "__main__":
    key = jax.random.PRNGKey(0)
    k_x, k_w, k_b, k_g, k_be = jax.random.split(key, 5)

    N, Cin, H, W = 2, 4, 16, 16
    Cout = 8

    x = jax.random.normal(k_x, (N, Cin, H, W), dtype=jnp.float32)

    # Parameter init (shapes per nn.Conv2d / nn.BatchNorm2d); non-trivial affine params
    # so the folded BN scale/shift path is actually exercised.
    fan_in = Cin * 3 * 3
    bound = 1.0 / math.sqrt(fan_in)
    conv_w = jax.random.uniform(k_w, (Cout, Cin, 3, 3), minval=-bound, maxval=bound,
                                dtype=jnp.float32)
    conv_b = jax.random.uniform(k_b, (Cout,), minval=-bound, maxval=bound, dtype=jnp.float32)
    bn_gamma = jax.random.uniform(k_g, (Cout,), minval=0.8, maxval=1.2, dtype=jnp.float32)
    bn_beta = jax.random.uniform(k_be, (Cout,), minval=-0.2, maxval=0.2, dtype=jnp.float32)

    out = down_conv(x, conv_w, conv_b, bn_gamma, bn_beta)
    out = jax.block_until_ready(out)

    ref = _reference(x, conv_w, conv_b, bn_gamma, bn_beta)
    assert out.shape == (N, Cout, H // 2, W // 2), out.shape
    # Error budget vs. the pure-f32 reference: bf16 input/weight staging (~2^-9 rel) plus
    # the bf16 y intermediate (~2^-9 rel, amplified by 1/std in BN) -> worst case ~2e-2.
    assert jnp.allclose(out, ref, atol=3e-2, rtol=3e-2), \
        float(jnp.max(jnp.abs(out - ref)))

    print("KERNEL_OK")
</pallas_src>

<mosaic_0001>
module attributes {stable_mosaic.version = 11 : i64} {
  func.func @_conv_stats_kernel(%arg0: i32, %arg1: memref<1x12x72xbf16, #tpu.memory_space<vmem>>, %arg2: memref<1x12x64xbf16, #tpu.memory_space<vmem>>, %arg3: memref<3x8x12xbf16, #tpu.memory_space<vmem>>, %arg4: memref<1x8x64xbf16, #tpu.memory_space<vmem>>, %arg5: memref<1x8x1xf32, #tpu.memory_space<vmem>>, %arg6: memref<1x8x1xf32, #tpu.memory_space<vmem>>) attributes {dimension_semantics = [#tpu.dimension_semantics<parallel>], iteration_bounds = array<i64: 2>, scalar_prefetch = 0 : i64, scratch_operands = 0 : i64, tpu.core_type = #tpu.core_type<tc>, window_params = [{transform_indices = @transform_0, window_bounds = array<i64: 1, 12, 72>}, {transform_indices = @transform_1, window_bounds = array<i64: 1, 12, 64>}, {pipeline_mode = #tpu.pipeline_mode<synchronous>, transform_indices = @transform_2, window_bounds = array<i64: 3, 8, 12>}, {transform_indices = @transform_3, window_bounds = array<i64: 1, 8, 64>}, {transform_indices = @transform_4, window_bounds = array<i64: 1, 8, 1>}, {transform_indices = @transform_5, window_bounds = array<i64: 1, 8, 1>}]} {
    %c0 = arith.constant 0 : index
    %c0_0 = arith.constant 0 : index
    %c0_1 = arith.constant 0 : index
    %0 = vector.load %arg1[%c0, %c0_0, %c0_1] : memref<1x12x72xbf16, #tpu.memory_space<vmem>>, vector<1x12x72xbf16>
    %1 = vector.shape_cast %0 : vector<1x12x72xbf16> to vector<12x72xbf16>
    %c0_2 = arith.constant 0 : index
    %c0_3 = arith.constant 0 : index
    %c0_4 = arith.constant 0 : index
    %2 = vector.load %arg2[%c0_2, %c0_3, %c0_4] : memref<1x12x64xbf16, #tpu.memory_space<vmem>>, vector<1x12x64xbf16>
    %3 = vector.shape_cast %2 : vector<1x12x64xbf16> to vector<12x64xbf16>
    %c0_5 = arith.constant 0 : index
    %c0_6 = arith.constant 0 : index
    %c0_7 = arith.constant 0 : index
    %4 = vector.load %arg3[%c0_5, %c0_6, %c0_7] : memref<3x8x12xbf16, #tpu.memory_space<vmem>>, vector<1x8x12xbf16>
    %5 = vector.shape_cast %4 : vector<1x8x12xbf16> to vector<8x12xbf16>
    %6 = vector.extract_strided_slice %1 {offsets = [0, 0], sizes = [12, 64], strides = [1, 1]} : vector<12x72xbf16> to vector<12x64xbf16>
    %cst = arith.constant dense<0.000000e+00> : vector<8x64xf32>
    %7 = tpu.matmul %5, %6, %cst {dimension_numbers = #tpu.dot_dimension_numbers<[1], [0], [0], [1], [0, 0, 1, 1], [], []>} : vector<8x12xbf16>, vector<12x64xbf16>, vector<8x64xf32> -> vector<8x64xf32>
    %c1 = arith.constant 1 : index
    %c0_8 = arith.constant 0 : index
    %c0_9 = arith.constant 0 : index
    %8 = vector.load %arg3[%c1, %c0_8, %c0_9] : memref<3x8x12xbf16, #tpu.memory_space<vmem>>, vector<1x8x12xbf16>
    %9 = vector.shape_cast %8 : vector<1x8x12xbf16> to vector<8x12xbf16>
    %cst_10 = arith.constant dense<0.000000e+00> : vector<8x64xf32>
    %10 = tpu.matmul %9, %3, %cst_10 {dimension_numbers = #tpu.dot_dimension_numbers<[1], [0], [0], [1], [0, 0, 1, 1], [], []>} : vector<8x12xbf16>, vector<12x64xbf16>, vector<8x64xf32> -> vector<8x64xf32>
    %11 = arith.addf %7, %10 : vector<8x64xf32>
    %c2 = arith.constant 2 : index
    %c0_11 = arith.constant 0 : index
    %c0_12 = arith.constant 0 : index
    %12 = vector.load %arg3[%c2, %c0_11, %c0_12] : memref<3x8x12xbf16, #tpu.memory_space<vmem>>, vector<1x8x12xbf16>
    %13 = vector.shape_cast %12 : vector<1x8x12xbf16> to vector<8x12xbf16>
    %14 = vector.extract_strided_slice %1 {offsets = [0, 8], sizes = [12, 64], strides = [1, 1]} : vector<12x72xbf16> to vector<12x64xbf16>
    %cst_13 = arith.constant dense<0.000000e+00> : vector<8x64xf32>
    %15 = tpu.matmul %13, %14, %cst_13 {dimension_numbers = #tpu.dot_dimension_numbers<[1], [0], [0], [1], [0, 0, 1, 1], [], []>} : vector<8x12xbf16>, vector<12x64xbf16>, vector<8x64xf32> -> vector<8x64xf32>
    %16 = arith.addf %11, %15 : vector<8x64xf32>
    %cst_14 = arith.constant dense<0.000000e+00> : vector<8xf32>
    %17 = vector.multi_reduction <add>, %16, %cst_14 [1] : vector<8x64xf32> to vector<8xf32>
    %18 = vector.shape_cast %17 : vector<8xf32> to vector<8x1xf32>
    %cst_15 = arith.constant 1.562500e-02 : f32
    %19 = vector.broadcast %cst_15 : f32 to vector<8x1xf32>
    %20 = arith.mulf %18, %19 : vector<8x1xf32>
    %21 = vector.broadcast %20 : vector<8x1xf32> to vector<8x64xf32>
    %22 = arith.subf %16, %21 : vector<8x64xf32>
    %23 = arith.mulf %22, %22 : vector<8x64xf32>
    %cst_16 = arith.constant dense<0.000000e+00> : vector<8xf32>
    %24 = vector.multi_reduction <add>, %23, %cst_16 [1] : vector<8x64xf32> to vector<8xf32>
    %25 = vector.shape_cast %24 : vector<8xf32> to vector<8x1xf32>
    %26 = vector.shape_cast %18 : vector<8x1xf32> to vector<1x8x1xf32>
    %c0_17 = arith.constant 0 : index
    %c0_18 = arith.constant 0 : index
    %c0_19 = arith.constant 0 : index
    %27 = vector.load %arg5[%c0_17, %c0_18, %c0_19] : memref<1x8x1xf32, #tpu.memory_space<vmem>>, vector<1x8x1xf32>
    tpu.vector_store %arg5[%c0_17, %c0_18, %c0_19], %26 {strides = array<i32>} : memref<1x8x1xf32, #tpu.memory_space<vmem>>, vector<1x8x1xf32>,
    %28 = vector.shape_cast %25 : vector<8x1xf32> to vector<1x8x1xf32>
    %c0_20 = arith.constant 0 : index
    %c0_21 = arith.constant 0 : index
    %c0_22 = arith.constant 0 : index
    %29 = vector.load %arg6[%c0_20, %c0_21, %c0_22] : memref<1x8x1xf32, #tpu.memory_space<vmem>>, vector<1x8x1xf32>
    tpu.vector_store %arg6[%c0_20, %c0_21, %c0_22], %28 {strides = array<i32>} : memref<1x8x1xf32, #tpu.memory_space<vmem>>, vector<1x8x1xf32>,
    %30 = arith.truncf %16 : vector<8x64xf32> to vector<8x64xbf16>
    %c0_23 = arith.constant 0 : index
    %c0_24 = arith.constant 0 : index
    %c0_25 = arith.constant 0 : index
    %31 = vector.load %arg4[%c0_23, %c0_24, %c0_25] : memref<1x8x64xbf16, #tpu.memory_space<vmem>>, vector<1x8x64xbf16>
    %32 = vector.shape_cast %31 : vector<1x8x64xbf16> to vector<8x64xbf16>
    %33 = vector.shape_cast %30 : vector<8x64xbf16> to vector<1x8x64xbf16>
    tpu.vector_store %arg4[%c0_23, %c0_24, %c0_25], %33 {strides = array<i32>} : memref<1x8x64xbf16, #tpu.memory_space<vmem>>, vector<1x8x64xbf16>,
    return
  }
  func.func @transform_0(%arg0: i32) -> (i32, i32, i32) {
    %c0_i32 = arith.constant 0 : i32
    %c0_i32_0 = arith.constant 0 : i32
    %c0_i32_1 = arith.constant 0 : i32
    return %arg0, %c0_i32, %c0_i32_0 : i32, i32, i32
  }
  func.func @transform_1(%arg0: i32) -> (i32, i32, i32) {
    %c0_i32 = arith.constant 0 : i32
    %c0_i32_0 = arith.constant 0 : i32
    %c0_i32_1 = arith.constant 0 : i32
    return %arg0, %c0_i32, %c0_i32_0 : i32, i32, i32
  }
  func.func @transform_2(%arg0: i32) -> (i32, i32, i32) {
    %c0_i32 = arith.constant 0 : i32
    %c0_i32_0 = arith.constant 0 : i32
    %c0_i32_1 = arith.constant 0 : i32
    %c0_i32_2 = arith.constant 0 : i32
    return %c0_i32, %c0_i32_0, %c0_i32_1 : i32, i32, i32
  }
  func.func @transform_3(%arg0: i32) -> (i32, i32, i32) {
    %c0_i32 = arith.constant 0 : i32
    %c0_i32_0 = arith.constant 0 : i32
    %c0_i32_1 = arith.constant 0 : i32
    return %arg0, %c0_i32, %c0_i32_0 : i32, i32, i32
  }
  func.func @transform_4(%arg0: i32) -> (i32, i32, i32) {
    %c0_i32 = arith.constant 0 : i32
    %c0_i32_0 = arith.constant 0 : i32
    %c0_i32_1 = arith.constant 0 : i32
    return %arg0, %c0_i32, %c0_i32_0 : i32, i32, i32
  }
  func.func @transform_5(%arg0: i32) -> (i32, i32, i32) {
    %c0_i32 = arith.constant 0 : i32
    %c0_i32_0 = arith.constant 0 : i32
    %c0_i32_1 = arith.constant 0 : i32
    return %arg0, %c0_i32, %c0_i32_0 : i32, i32, i32
  }
}

module attributes {stable_mosaic.version = 11 : i64} {
  func.func @_bn_gelu_kernel(%arg0: i32, %arg1: i32, %arg2: memref<1x8x64xbf16, #tpu.memory_space<vmem>>, %arg3: memref<8x1xf32, #tpu.memory_space<vmem>>, %arg4: memref<8x1xf32, #tpu.memory_space<vmem>>, %arg5: memref<1x8x64xf32, #tpu.memory_space<vmem>>) attributes {dimension_semantics = [#tpu.dimension_semantics<parallel>, #tpu.dimension_semantics<parallel>], iteration_bounds = array<i64: 2, 1>, scalar_prefetch = 0 : i64, scratch_operands = 0 : i64, tpu.core_type = #tpu.core_type<tc>, window_params = [{transform_indices = @transform_0, window_bounds = array<i64: 1, 8, 64>}, {pipeline_mode = #tpu.pipeline_mode<synchronous>, transform_indices = @transform_1, window_bounds = array<i64: 8, 1>}, {pipeline_mode = #tpu.pipeline_mode<synchronous>, transform_indices = @transform_2, window_bounds = array<i64: 8, 1>}, {transform_indices = @transform_3, window_bounds = array<i64: 1, 8, 64>}]} {
    %c0 = arith.constant 0 : index
    %c0_0 = arith.constant 0 : index
    %c0_1 = arith.constant 0 : index
    %0 = vector.load %arg2[%c0, %c0_0, %c0_1] : memref<1x8x64xbf16, #tpu.memory_space<vmem>>, vector<1x8x64xbf16>
    %1 = vector.shape_cast %0 : vector<1x8x64xbf16> to vector<8x64xbf16>
    %2 = arith.extf %1 : vector<8x64xbf16> to vector<8x64xf32>
    %c0_2 = arith.constant 0 : index
    %c0_3 = arith.constant 0 : index
    %3 = vector.load %arg3[%c0_2, %c0_3] : memref<8x1xf32, #tpu.memory_space<vmem>>, vector<8x1xf32>
    %4 = vector.broadcast %3 : vector<8x1xf32> to vector<8x64xf32>
    %5 = arith.mulf %2, %4 : vector<8x64xf32>
    %c0_4 = arith.constant 0 : index
    %c0_5 = arith.constant 0 : index
    %6 = vector.load %arg4[%c0_4, %c0_5] : memref<8x1xf32, #tpu.memory_space<vmem>>, vector<8x1xf32>
    %7 = vector.broadcast %6 : vector<8x1xf32> to vector<8x64xf32>
    %8 = arith.addf %5, %7 : vector<8x64xf32>
    %cst = arith.constant 5.000000e-01 : f32
    %9 = vector.broadcast %cst : f32 to vector<8x64xf32>
    %10 = arith.mulf %9, %8 : vector<8x64xf32>
    %cst_6 = arith.constant 0.707106769 : f32
    %11 = vector.broadcast %cst_6 : f32 to vector<8x64xf32>
    %12 = arith.mulf %8, %11 : vector<8x64xf32>
    %13 = math.erf %12 : vector<8x64xf32>
    %cst_7 = arith.constant 1.000000e+00 : f32
    %14 = vector.broadcast %cst_7 : f32 to vector<8x64xf32>
    %15 = arith.addf %14, %13 : vector<8x64xf32>
    %16 = arith.mulf %10, %15 : vector<8x64xf32>
    %c0_8 = arith.constant 0 : index
    %c0_9 = arith.constant 0 : index
    %c0_10 = arith.constant 0 : index
    %17 = vector.load %arg5[%c0_8, %c0_9, %c0_10] : memref<1x8x64xf32, #tpu.memory_space<vmem>>, vector<1x8x64xf32>
    %18 = vector.shape_cast %17 : vector<1x8x64xf32> to vector<8x64xf32>
    %19 = vector.shape_cast %16 : vector<8x64xf32> to vector<1x8x64xf32>
    tpu.vector_store %arg5[%c0_8, %c0_9, %c0_10], %19 {strides = array<i32>} : memref<1x8x64xf32, #tpu.memory_space<vmem>>, vector<1x8x64xf32>,
    return
  }
  func.func @transform_0(%arg0: i32, %arg1: i32) -> (i32, i32, i32) {
    %c0_i32 = arith.constant 0 : i32
    %c0_i32_0 = arith.constant 0 : i32
    return %arg0, %c0_i32, %arg1 : i32, i32, i32
  }
  func.func @transform_1(%arg0: i32, %arg1: i32) -> (i32, i32) {
    %c0_i32 = arith.constant 0 : i32
    %c0_i32_0 = arith.constant 0 : i32
    %c0_i32_1 = arith.constant 0 : i32
    return %c0_i32, %c0_i32_0 : i32, i32
  }
  func.func @transform_2(%arg0: i32, %arg1: i32) -> (i32, i32) {
    %c0_i32 = arith.constant 0 : i32
    %c0_i32_0 = arith.constant 0 : i32
    %c0_i32_1 = arith.constant 0 : i32
    return %c0_i32, %c0_i32_0 : i32, i32
  }
  func.func @transform_3(%arg0: i32, %arg1: i32) -> (i32, i32, i32) {
    %c0_i32 = arith.constant 0 : i32
    %c0_i32_0 = arith.constant 0 : i32
    return %arg0, %c0_i32, %arg1 : i32, i32, i32
  }
}

</mosaic_0001>

<llo_original>
// kernel: down_conv.3
$region0: #{down_conv.3}
  #allocation0 [shape = 'u32[]', space=smem, size = 0x4, offset = 0x4, fixed_abs, tag = 'smem constant byte address 0x4 - core index']
  #allocation1 [shape = 'u32[144,128]{1,0:T(1,128)}', space=vmem, size = 0x12000, scoped, tag = 'internal scratch']
  %s0 = inlined_call_operand.vmem [shape: bf16[2,8,64], index: 0, kind: input, shape index: {}]
  %s1 = inlined_call_operand.vmem [shape: f32[8,1], index: 1, kind: input, shape index: {}]
  %s2 = inlined_call_operand.vmem [shape: f32[8,1], index: 2, kind: input, shape index: {}]
  %s3 = inlined_call_operand.vmem [shape: f32[2,8,64], index: 3, kind: output, shape index: {}]
  %s4 = sld [smem:[#allocation0]]
  $region45: #{down_conv.3} parent=0
    _
  %s6 = ssub.s32 1, %s4
  %s7 = scalar_select 0, %s6, %s4
  loop: start=0, step=1, limit=4
  $region2: #{down_conv.3} parent=0 // loop_pre_header
    _
  $region3: #{down_conv.3} parent=0 // loop_header
    %s9 = sphi 0, %s13
    %p10 = scmp.ge.s32.totalorder %s9, 4
    %s16 = sphi 0, %s28
    %s17 = sphi 0, %s24
    %s18 = sphi 0, %s16
    %s19 = sphi 0, %s17
    %s20 = sphi 0, %s18
    %s21 = sphi 0, %s19
    %s33 = sphi 0, %s35
    %s36 = sphi 0, %s33
    %s37 = sphi 0, %s36
    %s53 = sphi 0, %s37
    %s57 = sphi 0, %s57
    %s59 = sphi 0, %s57
    %s60 = sphi 0, %s59
    %s74 = sphi 0, %s60
    %s78 = sphi 0, %s78
    %s80 = sphi 0, %s78
    %s81 = sphi 0, %s80
    %s95 = sphi 0, %s81
    %s103 = sphi 0, %s105
    %s106 = sphi 0, %s103
    %s107 = sphi 0, %s106
    %s123 = sphi 0, %s107
  $region4: #{down_conv.3} parent=0 // loop_header_branch
    %12 = sbr.rel (%p10) target = $region8
  $region5: #{down_conv.3} parent=0 // loop_body
    %s14 = ssub.s32 %s9, 1
    %s15 = ssub.s32 %s9, 2
    %s22 = sadd.s32 1, %s17
    %p23 = scmp.ge.s32.totalorder %s22, 1
    %s24 = scalar_select %p23, 0, %s22
    %s25 = sadd.s32 1, %s16
    %s26 = scalar_select %p23, %s25, %s16
    %p27 = scmp.ge.s32.totalorder %s26, 2
    %s28 = scalar_select %p27, 0, %s26
    %s29 = ssub.s32 %s16, %s28
    %s30 = ssub.s32 %s17, %s24
    %s31 = sor.u32 %s29, %s30
    %p32 = scmp.eq.s32.totalorder %s31, 0
    %s34 = sadd.s32 %s33, 1
    %s35 = scalar_select %p32, %s33, %s34
    %p38 = pneg %p32
    %p39 = scmp.eq.s32.totalorder %s9, 1
    %p40 = por %p38, %p39
    %p41 = scmp.ne.s32.totalorder %s33, %s36
    %p42 = scmp.eq.s32.totalorder %s9, 0
    %p43 = por %p41, %p42
    %p44 = scmp.ne.s32.totalorder %s33, %s36
    %p45 = scmp.eq.s32.totalorder %s14, 1
    %p46 = por %p44, %p45
    %p47 = scmp.ne.s32.totalorder %s36, %s37
    %p48 = scmp.eq.s32.totalorder %s14, 0
    %p49 = por %p47, %p48
    %p50 = scmp.ne.s32.totalorder %s36, %s37
    %p51 = scmp.eq.s32.totalorder %s15, 1
    %p52 = por %p50, %p51
    %p54 = scmp.ne.s32.totalorder %s37, %s53
    %p55 = scmp.eq.s32.totalorder %s15, 0
    %p56 = por %p54, %p55
    %s58 = sadd.s32 %s57, 1
    %p61 = scmp.eq.s32.totalorder %s9, 1
    %p62 = scmp.ne.s32.totalorder %s57, %s59
    %p63 = scmp.eq.s32.totalorder %s9, 0
    %p64 = por %p62, %p63
    %p65 = scmp.ne.s32.totalorder %s57, %s59
    %p66 = scmp.eq.s32.totalorder %s14, 1
    %p67 = por %p65, %p66
    %p68 = scmp.ne.s32.totalorder %s59, %s60
    %p69 = scmp.eq.s32.totalorder %s14, 0
    %p70 = por %p68, %p69
    %p71 = scmp.ne.s32.totalorder %s59, %s60
    %p72 = scmp.eq.s32.totalorder %s15, 1
    %p73 = por %p71, %p72
    %p75 = scmp.ne.s32.totalorder %s60, %s74
    %p76 = scmp.eq.s32.totalorder %s15, 0
    %p77 = por %p75, %p76
    %s79 = sadd.s32 %s78, 1
    %p82 = scmp.eq.s32.totalorder %s9, 1
    %p83 = scmp.ne.s32.totalorder %s78, %s80
    %p84 = scmp.eq.s32.totalorder %s9, 0
    %p85 = por %p83, %p84
    %p86 = scmp.ne.s32.totalorder %s78, %s80
    %p87 = scmp.eq.s32.totalorder %s14, 1
    %p88 = por %p86, %p87
    %p89 = scmp.ne.s32.totalorder %s80, %s81
    %p90 = scmp.eq.s32.totalorder %s14, 0
    %p91 = por %p89, %p90
    %p92 = scmp.ne.s32.totalorder %s80, %s81
    %p93 = scmp.eq.s32.totalorder %s15, 1
    %p94 = por %p92, %p93
    %p96 = scmp.ne.s32.totalorder %s81, %s95
    %p97 = scmp.eq.s32.totalorder %s15, 0
    %p98 = por %p96, %p97
    %s99 = ssub.s32 %s16, %s28
    %s100 = ssub.s32 %s17, %s24
    %s101 = sor.u32 %s99, %s100
    %p102 = scmp.eq.s32.totalorder %s101, 0
    %s104 = sadd.s32 %s103, 1
    %s105 = scalar_select %p102, %s103, %s104
    %p108 = pneg %p102
    %p109 = scmp.eq.s32.totalorder %s9, 1
    %p110 = por %p108, %p109
    %p111 = scmp.ne.s32.totalorder %s103, %s106
    %p112 = scmp.eq.s32.totalorder %s9, 0
    %p113 = por %p111, %p112
    %p114 = scmp.ne.s32.totalorder %s103, %s106
    %p115 = scmp.eq.s32.totalorder %s14, 1
    %p116 = por %p114, %p115
    %p117 = scmp.ne.s32.totalorder %s106, %s107
    %p118 = scmp.eq.s32.totalorder %s14, 0
    %p119 = por %p117, %p118
    %p120 = scmp.ne.s32.totalorder %s106, %s107
    %p121 = scmp.eq.s32.totalorder %s15, 1
    %p122 = por %p120, %p121
    %p124 = scmp.ne.s32.totalorder %s107, %s123
    %p125 = scmp.eq.s32.totalorder %s15, 0
    %p126 = por %p124, %p125
    %p127 = scmp.le.s32.totalorder 1, %s9
    %p128 = scmp.lt.s32.totalorder %s9, 3
    %p129 = pnand %p127, %p128
    %p130 = pneg %p129
    // Predicated region
    $region9: #{down_conv.3} parent=5 // pred_check
      _
    $region10: #{down_conv.3} parent=5 // pred_check_branch
      %132 = sbr.rel (%p129) target = $region12
    $region11: #{down_conv.3} parent=5 // pred_region
      %s133 = ssub.s32 %s9, 1
      // Predicated region
      $region13: #{down_conv.3} parent=11 // pred_check
        %p134 = pneg %p70
      $region14: #{down_conv.3} parent=11 // pred_check_branch
        %136 = sbr.rel (%p134) target = $region16
      $region15: #{down_conv.3} parent=11 // pred_region
        _
      $region16: #{down_conv.3} parent=11 // pred_fallthru
        _
      // Predicated region
      $region17: #{down_conv.3} parent=11 // pred_check
        %p137 = pneg %p91
      $region18: #{down_conv.3} parent=11 // pred_check_branch
        %139 = sbr.rel (%p137) target = $region20
      $region19: #{down_conv.3} parent=11 // pred_region
        _
      $region20: #{down_conv.3} parent=11 // pred_fallthru
        _
    $region12: #{down_conv.3} parent=5 // pred_fallthru
      _
    %p140 = scmp.lt.s32.totalorder %s9, 2
    // Predicated region
    $region21: #{down_conv.3} parent=5 // pred_check
      %p141 = pneg %p140
    $region22: #{down_conv.3} parent=5 // pred_check_branch
      %143 = sbr.rel (%p141) target = $region24
    $region23: #{down_conv.3} parent=5 // pred_region
      // Predicated region
      $region25: #{down_conv.3} parent=23 // pred_check
        %p144 = pneg %p43
      $region26: #{down_conv.3} parent=23 // pred_check_branch
        %146 = sbr.rel (%p144) target = $region28
      $region27: #{down_conv.3} parent=23 // pred_region
        %p147 = scmp.lt.s32.totalorder %s16, 1
        %s148 = scalar_select %p147, %s16, 1
        %p149 = scmp.lt.s32.totalorder %s17, 0
        %s150 = scalar_select %p149, %s17, 0
        %s151 = sadd.s32 %s150, %s148
        %s152 = smul.addr %s151, 4
        %s153 = scalar_lea.vmem %s0, %s152
      $region28: #{down_conv.3} parent=23 // pred_fallthru
        _
    $region24: #{down_conv.3} parent=5 // pred_fallthru
      _
    %p154 = scmp.le.s32.totalorder 1, %s9
    %p155 = scmp.lt.s32.totalorder %s9, 3
    %p156 = pnand %p154, %p155
    %p157 = pneg %p156
    // Predicated region
    $region29: #{down_conv.3} parent=5 // pred_check
      _
    $region30: #{down_conv.3} parent=5 // pred_check_branch
      %159 = sbr.rel (%p156) target = $region32
    $region31: #{down_conv.3} parent=5 // pred_region
      %s160 = ssub.s32 %s9, 1
      %p161 = scmp.lt.s32.totalorder %s18, 1
      %s162 = scalar_select %p161, %s18, 1
      %p163 = scmp.lt.s32.totalorder %s19, 0
      %s164 = scalar_select %p163, %s19, 0
      %s165 = sadd.s32 %s164, %s162
      %s166 = smul.addr %s165, 4
      %s167 = scalar_lea.vmem %s0, %s166
      %p168 = pneg %p49
      %p169 = pneg %p46
      %p170 = pneg %p70
      %p171 = pneg %p67
      %p172 = pneg %p91
      %p173 = pneg %p88
      %p174 = pneg %p119
      %p175 = pneg %p116
      %p176 = scmp.lt.s32.totalorder %s18, 1
      %s177 = scalar_select %p176, %s18, 1
      %p178 = scmp.lt.s32.totalorder %s19, 0
      %s179 = scalar_select %p178, %s19, 0
      %s180 = sadd.s32 %s179, %s177
      %s181 = smul.addr %s180, 8
      %s182 = scalar_lea.vmem %s3, %s181
      %p183 = scmp.lt.s32.totalorder %s18, 1
      %s184 = scalar_select %p183, %s18, 1
      %p185 = scmp.lt.s32.totalorder %s19, 0
      %s186 = scalar_select %p185, %s19, 0
      %s187 = sadd.s32 %s186, %s184
      %s188 = smul.addr %s187, 4
      %s189 = scalar_lea.vmem %s0, %s188
      %p190 = scmp.lt.s32.totalorder %s18, 1
      %s191 = scalar_select %p190, %s18, 1
      %p192 = scmp.lt.s32.totalorder %s19, 0
      %s193 = scalar_select %p192, %s19, 0
      %s194 = sadd.s32 %s193, %s191
      %s195 = smul.addr %s194, 8
      %s196 = scalar_lea.vmem %s3, %s195
      %v197 = vld [vmem:[%s189] sm:$0xf]
      %v198 = vunpack.c.l.bf16 %v197
      %v199 = vld [vmem:[%s1] sm:$0xff]
      %201 = vset.pattern.permute.xlu0 0
      %202 = vperm.xlu0 %201, %v199
      %v203 = vpop.permute.xlu0 %202
      %v205 = vmul.f32 %v198, %v203
      %v206 = vld [vmem:[%s2] sm:$0xff]
      %208 = vset.pattern.permute.xlu0 0
      %209 = vperm.xlu0 %208, %v206
      %v210 = vpop.permute.xlu0 %209
      %v212 = vadd.f32 %v205, %v210
      %v213 = vmul.f32 %v212, 0.5
      %v214 = vmul.f32 %v212, 0.70710677
      %v215 = verf.f32.pop %v214
      %v216 = vadd.f32 %v215, 1.0
      %v217 = vmul.f32 %v213, %v216
      %vm218 = vcmask 523264
      %219 = vst.msk [vmem:[%s196] sm:$0xff] %vm218, %v217
      %p220 = scmp.lt.s32.totalorder %s18, 1
      %s221 = scalar_select %p220, %s18, 1
      %p222 = scmp.lt.s32.totalorder %s19, 0
      %s223 = scalar_select %p222, %s19, 0
      %s224 = sadd.s32 %s223, %s221
      %s225 = smul.addr %s224, 8
      %s226 = scalar_lea.vmem %s3, %s225
      // Predicated region
      $region33: #{down_conv.3} parent=31 // pred_check
        %p227 = pneg %p116
      $region34: #{down_conv.3} parent=31 // pred_check_branch
        %229 = sbr.rel (%p227) target = $region36
      $region35: #{down_conv.3} parent=31 // pred_region
        _
      $region36: #{down_conv.3} parent=31 // pred_fallthru
        _
    $region32: #{down_conv.3} parent=5 // pred_fallthru
      _
    %p230 = scmp.le.s32.totalorder 2, %s9
    // Predicated region
    $region37: #{down_conv.3} parent=5 // pred_check
      %p231 = pneg %p230
    $region38: #{down_conv.3} parent=5 // pred_check_branch
      %233 = sbr.rel (%p231) target = $region40
    $region39: #{down_conv.3} parent=5 // pred_region
      %s234 = ssub.s32 %s9, 2
      // Predicated region
      $region41: #{down_conv.3} parent=39 // pred_check
        %p235 = pneg %p122
      $region42: #{down_conv.3} parent=39 // pred_check_branch
        %237 = sbr.rel (%p235) target = $region44
      $region43: #{down_conv.3} parent=39 // pred_region
        %p238 = scmp.lt.s32.totalorder %s20, 1
        %s239 = scalar_select %p238, %s20, 1
        %p240 = scmp.lt.s32.totalorder %s21, 0
        %s241 = scalar_select %p240, %s21, 0
        %s242 = sadd.s32 %s241, %s239
        %s243 = smul.addr %s242, 8
        %s244 = scalar_lea.vmem %s3, %s243
      $region44: #{down_conv.3} parent=39 // pred_fallthru
        _
    $region40: #{down_conv.3} parent=5 // pred_fallthru
      _
  $region6: #{down_conv.3} parent=0 // loop_footer
    %s13 = sadd.s32 1, %s9
  $region7: #{down_conv.3} parent=0 // loop_footer_branch
    %8 = sbr.rel target = $region3
  $region8: #{down_conv.3} parent=0 // loop_exit
    _

// kernel: down_conv.2
$region0: #{down_conv.2}
  #allocation0 [shape = 'u32[]', space=smem, size = 0x4, offset = 0x4, fixed_abs, tag = 'smem constant byte address 0x4 - core index']
  #allocation1 [shape = 'u32[144,128]{1,0:T(1,128)}', space=vmem, size = 0x12000, scoped, tag = 'internal scratch']
  %s0 = inlined_call_operand.vmem [shape: bf16[2,12,72], index: 0, kind: input, shape index: {}]
  %s1 = inlined_call_operand.vmem [shape: bf16[2,12,64], index: 1, kind: input, shape index: {}]
  %s2 = inlined_call_operand.vmem [shape: bf16[3,8,12], index: 2, kind: input, shape index: {}]
  %s3 = inlined_call_operand.vmem [shape: bf16[2,8,64], index: 3, kind: output, shape index: {0}]
  %s4 = inlined_call_operand.vmem [shape: f32[2,8,1], index: 4, kind: output, shape index: {1}]
  %s5 = inlined_call_operand.vmem [shape: f32[2,8,1], index: 5, kind: output, shape index: {2}]
  %6 = xla_tuple %s3, %s4, %s5
  %s7 = sld [smem:[#allocation0]]
  $region61: #{down_conv.2} parent=0
    _
  %s9 = ssub.s32 1, %s7
  %s10 = scalar_select 0, %s9, %s7
  loop: start=0, step=1, limit=4
  $region2: #{down_conv.2} parent=0 // loop_pre_header
    _
  $region3: #{down_conv.2} parent=0 // loop_header
    %s12 = sphi 0, %s16
    %p13 = scmp.ge.s32.totalorder %s12, 4
    %s22 = sphi 0, %s24
    %s25 = sphi 0, %s22
    %s26 = sphi 0, %s25
    %s42 = sphi 0, %s26
    %s48 = sphi 0, %s50
    %s51 = sphi 0, %s48
    %s52 = sphi 0, %s51
    %s68 = sphi 0, %s52
    %s72 = sphi 0, %s72
    %s74 = sphi 0, %s72
    %s75 = sphi 0, %s74
    %s89 = sphi 0, %s75
    %s95 = sphi 0, %s97
    %s98 = sphi 0, %s95
    %s99 = sphi 0, %s98
    %s115 = sphi 0, %s99
    %s121 = sphi 0, %s123
    %s124 = sphi 0, %s121
    %s125 = sphi 0, %s124
    %s141 = sphi 0, %s125
    %s147 = sphi 0, %s149
    %s150 = sphi 0, %s147
    %s151 = sphi 0, %s150
    %s167 = sphi 0, %s151
  $region4: #{down_conv.2} parent=0 // loop_header_branch
    %15 = sbr.rel (%p13) target = $region8
  $region5: #{down_conv.2} parent=0 // loop_body
    %s17 = ssub.s32 %s12, 1
    %s18 = ssub.s32 %s12, 2
    %s19 = sadd.s32 %s12, 1
    %s20 = ssub.s32 %s12, %s19
    %p21 = scmp.eq.s32.totalorder %s20, 0
    %s23 = sadd.s32 %s22, 1
    %s24 = scalar_select %p21, %s22, %s23
    %p27 = pneg %p21
    %p28 = scmp.eq.s32.totalorder %s12, 1
    %p29 = por %p27, %p28
    %p30 = scmp.ne.s32.totalorder %s22, %s25
    %p31 = scmp.eq.s32.totalorder %s12, 0
    %p32 = por %p30, %p31
    %p33 = scmp.ne.s32.totalorder %s22, %s25
    %p34 = scmp.eq.s32.totalorder %s17, 1
    %p35 = por %p33, %p34
    %p36 = scmp.ne.s32.totalorder %s25, %s26
    %p37 = scmp.eq.s32.totalorder %s17, 0
    %p38 = por %p36, %p37
    %p39 = scmp.ne.s32.totalorder %s25, %s26
    %p40 = scmp.eq.s32.totalorder %s18, 1
    %p41 = por %p39, %p40
    %p43 = scmp.ne.s32.totalorder %s26, %s42
    %p44 = scmp.eq.s32.totalorder %s18, 0
    %p45 = por %p43, %p44
    %s46 = ssub.s32 %s12, %s19
    %p47 = scmp.eq.s32.totalorder %s46, 0
    %s49 = sadd.s32 %s48, 1
    %s50 = scalar_select %p47, %s48, %s49
    %p53 = pneg %p47
    %p54 = scmp.eq.s32.totalorder %s12, 1
    %p55 = por %p53, %p54
    %p56 = scmp.ne.s32.totalorder %s48, %s51
    %p57 = scmp.eq.s32.totalorder %s12, 0
    %p58 = por %p56, %p57
    %p59 = scmp.ne.s32.totalorder %s48, %s51
    %p60 = scmp.eq.s32.totalorder %s17, 1
    %p61 = por %p59, %p60
    %p62 = scmp.ne.s32.totalorder %s51, %s52
    %p63 = scmp.eq.s32.totalorder %s17, 0
    %p64 = por %p62, %p63
    %p65 = scmp.ne.s32.totalorder %s51, %s52
    %p66 = scmp.eq.s32.totalorder %s18, 1
    %p67 = por %p65, %p66
    %p69 = scmp.ne.s32.totalorder %s52, %s68
    %p70 = scmp.eq.s32.totalorder %s18, 0
    %p71 = por %p69, %p70
    %s73 = sadd.s32 %s72, 1
    %p76 = scmp.eq.s32.totalorder %s12, 1
    %p77 = scmp.ne.s32.totalorder %s72, %s74
    %p78 = scmp.eq.s32.totalorder %s12, 0
    %p79 = por %p77, %p78
    %p80 = scmp.ne.s32.totalorder %s72, %s74
    %p81 = scmp.eq.s32.totalorder %s17, 1
    %p82 = por %p80, %p81
    %p83 = scmp.ne.s32.totalorder %s74, %s75
    %p84 = scmp.eq.s32.totalorder %s17, 0
    %p85 = por %p83, %p84
    %p86 = scmp.ne.s32.totalorder %s74, %s75
    %p87 = scmp.eq.s32.totalorder %s18, 1
    %p88 = por %p86, %p87
    %p90 = scmp.ne.s32.totalorder %s75, %s89
    %p91 = scmp.eq.s32.totalorder %s18, 0
    %p92 = por %p90, %p91
    %s93 = ssub.s32 %s12, %s19
    %p94 = scmp.eq.s32.totalorder %s93, 0
    %s96 = sadd.s32 %s95, 1
    %s97 = scalar_select %p94, %s95, %s96
    %p100 = pneg %p94
    %p101 = scmp.eq.s32.totalorder %s12, 1
    %p102 = por %p100, %p101
    %p103 = scmp.ne.s32.totalorder %s95, %s98
    %p104 = scmp.eq.s32.totalorder %s12, 0
    %p105 = por %p103, %p104
    %p106 = scmp.ne.s32.totalorder %s95, %s98
    %p107 = scmp.eq.s32.totalorder %s17, 1
    %p108 = por %p106, %p107
    %p109 = scmp.ne.s32.totalorder %s98, %s99
    %p110 = scmp.eq.s32.totalorder %s17, 0
    %p111 = por %p109, %p110
    %p112 = scmp.ne.s32.totalorder %s98, %s99
    %p113 = scmp.eq.s32.totalorder %s18, 1
    %p114 = por %p112, %p113
    %p116 = scmp.ne.s32.totalorder %s99, %s115
    %p117 = scmp.eq.s32.totalorder %s18, 0
    %p118 = por %p116, %p117
    %s119 = ssub.s32 %s12, %s19
    %p120 = scmp.eq.s32.totalorder %s119, 0
    %s122 = sadd.s32 %s121, 1
    %s123 = scalar_select %p120, %s121, %s122
    %p126 = pneg %p120
    %p127 = scmp.eq.s32.totalorder %s12, 1
    %p128 = por %p126, %p127
    %p129 = scmp.ne.s32.totalorder %s121, %s124
    %p130 = scmp.eq.s32.totalorder %s12, 0
    %p131 = por %p129, %p130
    %p132 = scmp.ne.s32.totalorder %s121, %s124
    %p133 = scmp.eq.s32.totalorder %s17, 1
    %p134 = por %p132, %p133
    %p135 = scmp.ne.s32.totalorder %s124, %s125
    %p136 = scmp.eq.s32.totalorder %s17, 0
    %p137 = por %p135, %p136
    %p138 = scmp.ne.s32.totalorder %s124, %s125
    %p139 = scmp.eq.s32.totalorder %s18, 1
    %p140 = por %p138, %p139
    %p142 = scmp.ne.s32.totalorder %s125, %s141
    %p143 = scmp.eq.s32.totalorder %s18, 0
    %p144 = por %p142, %p143
    %s145 = ssub.s32 %s12, %s19
    %p146 = scmp.eq.s32.totalorder %s145, 0
    %s148 = sadd.s32 %s147, 1
    %s149 = scalar_select %p146, %s147, %s148
    %p152 = pneg %p146
    %p153 = scmp.eq.s32.totalorder %s12, 1
    %p154 = por %p152, %p153
    %p155 = scmp.ne.s32.totalorder %s147, %s150
    %p156 = scmp.eq.s32.totalorder %s12, 0
    %p157 = por %p155, %p156
    %p158 = scmp.ne.s32.totalorder %s147, %s150
    %p159 = scmp.eq.s32.totalorder %s17, 1
    %p160 = por %p158, %p159
    %p161 = scmp.ne.s32.totalorder %s150, %s151
    %p162 = scmp.eq.s32.totalorder %s17, 0
    %p163 = por %p161, %p162
    %p164 = scmp.ne.s32.totalorder %s150, %s151
    %p165 = scmp.eq.s32.totalorder %s18, 1
    %p166 = por %p164, %p165
    %p168 = scmp.ne.s32.totalorder %s151, %s167
    %p169 = scmp.eq.s32.totalorder %s18, 0
    %p170 = por %p168, %p169
    %p171 = scmp.le.s32.totalorder 1, %s12
    %p172 = scmp.lt.s32.totalorder %s12, 3
    %p173 = pnand %p171, %p172
    %p174 = pneg %p173
    // Predicated region
    $region9: #{down_conv.2} parent=5 // pred_check
      _
    $region10: #{down_conv.2} parent=5 // pred_check_branch
      %176 = sbr.rel (%p173) target = $region12
    $region11: #{down_conv.2} parent=5 // pred_region
      %s177 = ssub.s32 %s12, 1
      // Predicated region
      $region13: #{down_conv.2} parent=11 // pred_check
        %p178 = pneg %p85
      $region14: #{down_conv.2} parent=11 // pred_check_branch
        %180 = sbr.rel (%p178) target = $region16
      $region15: #{down_conv.2} parent=11 // pred_region
        _
      $region16: #{down_conv.2} parent=11 // pred_fallthru
        _
    $region12: #{down_conv.2} parent=5 // pred_fallthru
      _
    %p181 = scmp.lt.s32.totalorder %s12, 2
    // Predicated region
    $region17: #{down_conv.2} parent=5 // pred_check
      %p182 = pneg %p181
    $region18: #{down_conv.2} parent=5 // pred_check_branch
      %184 = sbr.rel (%p182) target = $region20
    $region19: #{down_conv.2} parent=5 // pred_region
      // Predicated region
      $region21: #{down_conv.2} parent=19 // pred_check
        %p185 = pneg %p32
      $region22: #{down_conv.2} parent=19 // pred_check_branch
        %187 = sbr.rel (%p185) target = $region24
      $region23: #{down_conv.2} parent=19 // pred_region
        %p188 = scmp.lt.s32.totalorder %s12, 1
        %s189 = scalar_select %p188, %s12, 1
        %s190 = smul.addr %s189, 2
        %s191 = smul.addr %s190, 4
        %s192 = scalar_lea.vmem %s0, %s191
      $region24: #{down_conv.2} parent=19 // pred_fallthru
        _
      // Predicated region
      $region25: #{down_conv.2} parent=19 // pred_check
        %p193 = pneg %p58
      $region26: #{down_conv.2} parent=19 // pred_check_branch
        %195 = sbr.rel (%p193) target = $region28
      $region27: #{down_conv.2} parent=19 // pred_region
        %p196 = scmp.lt.s32.totalorder %s12, 1
        %s197 = scalar_select %p196, %s12, 1
        %s198 = smul.addr %s197, 2
        %s199 = smul.addr %s198, 4
        %s200 = scalar_lea.vmem %s1, %s199
      $region28: #{down_conv.2} parent=19 // pred_fallthru
        _
    $region20: #{down_conv.2} parent=5 // pred_fallthru
      _
    %p201 = scmp.le.s32.totalorder 1, %s12
    %p202 = scmp.lt.s32.totalorder %s12, 3
    %p203 = pnand %p201, %p202
    %p204 = pneg %p203
    // Predicated region
    $region29: #{down_conv.2} parent=5 // pred_check
      _
    $region30: #{down_conv.2} parent=5 // pred_check_branch
      %206 = sbr.rel (%p203) target = $region32
    $region31: #{down_conv.2} parent=5 // pred_region
      %s207 = ssub.s32 %s12, 1
      %p208 = scmp.lt.s32.totalorder %s17, 1
      %s209 = scalar_select %p208, %s17, 1
      %s210 = smul.addr %s209, 2
      %s211 = smul.addr %s210, 4
      %s212 = scalar_lea.vmem %s0, %s211
      %p213 = pneg %p38
      %p214 = pneg %p35
      %p215 = scmp.lt.s32.totalorder %s17, 1
      %s216 = scalar_select %p215, %s17, 1
      %s217 = smul.addr %s216, 2
      %s218 = smul.addr %s217, 4
      %s219 = scalar_lea.vmem %s1, %s218
      %p220 = pneg %p64
      %p221 = pneg %p61
      %p222 = pneg %p85
      %p223 = pneg %p82
      %p224 = pneg %p111
      %p225 = pneg %p108
      %p226 = scmp.lt.s32.totalorder %s17, 1
      %s227 = scalar_select %p226, %s17, 1
      %s228 = smul.addr %s227, 4
      %s229 = scalar_lea.vmem %s3, %s228
      %p230 = pneg %p137
      %p231 = pneg %p134
      %p232 = scmp.lt.s32.totalorder %s17, 1
      %s233 = scalar_select %p232, %s17, 1
      %s234 = smul.addr %s233, 8
      %s235 = scalar_lea.vmem %s4, %s234
      %p236 = pneg %p163
      %p237 = pneg %p160
      %p238 = scmp.lt.s32.totalorder %s17, 1
      %s239 = scalar_select %p238, %s17, 1
      %s240 = smul.addr %s239, 8
      %s241 = scalar_lea.vmem %s5, %s240
      %p242 = scmp.lt.s32.totalorder %s17, 1
      %s243 = scalar_select %p242, %s17, 1
      %s244 = smul.addr %s243, 2
      %s245 = smul.addr %s244, 4
      %s246 = scalar_lea.vmem %s0, %s245
      %p247 = scmp.lt.s32.totalorder %s17, 1
      %s248 = scalar_select %p247, %s17, 1
      %s249 = smul.addr %s248, 2
      %s250 = smul.addr %s249, 4
      %s251 = scalar_lea.vmem %s1, %s250
      %p252 = scmp.lt.s32.totalorder %s17, 1
      %s253 = scalar_select %p252, %s17, 1
      %s254 = smul.addr %s253, 4
      %s255 = scalar_lea.vmem %s3, %s254
      %p256 = scmp.lt.s32.totalorder %s17, 1
      %s257 = scalar_select %p256, %s17, 1
      %s258 = smul.addr %s257, 8
      %s259 = scalar_lea.vmem %s4, %s258
      %p260 = scmp.lt.s32.totalorder %s17, 1
      %s261 = scalar_select %p260, %s17, 1
      %s262 = smul.addr %s261, 8
      %s263 = scalar_lea.vmem %s5, %s262
      %v265 = vld [vmem:[%s246] sm:$0xf]
      %v266 = vld [vmem:[%s246 + $0x4] sm:$0x3]
      %v267 = vld [vmem:[%s251] sm:$0xf]
      %v268 = vld [vmem:[%s251 + $0x4] sm:$0x3]
      %v269 = vld [vmem:[%s2] sm:$0xf]
      %s270 = scalar_lea.vmem %s2, 4
      %v271 = vld [vmem:[%s270] sm:$0xf]
      %v274 = vunpack.c.l.b16 %v267
      %v275 = vunpack.c.l.b16 %v268
      %v276 = vpack.c.b16 %v275, %v274
      %vm277 = vcmask 97280
      %v279 = vsel %vm277, %v271, 0
      %vm281 = vcmask 1045504
      %v283 = vsel %vm281, %v276, 0
      %285 = vmatprep.subr.bf16.mxu0 0
      %286 = vmatpush1.bf16.msra.mxu0 %v283
      %287 = vmatprep.subr.bf16.mxu0 0
      %288 = vmatpush1.bf16.msra.mxu0 0
      %289 = vmatprep.subr.bf16.mxu0 0
      %290 = vmatpush1.bf16.msra.mxu0 0
      %291 = vmatprep.subr.bf16.mxu0 0
      %292 = vmatpush1.bf16.msra.mxu0 0
      %293 = vmatprep.subr.bf16.mxu0 0
      %294 = vmatpush1.bf16.msra.mxu0 0
      %295 = vmatprep.subr.bf16.mxu0 0
      %296 = vmatpush1.bf16.msra.mxu0 0
      %297 = vmatprep.subr.bf16.mxu0 0
      %298 = vmatpush1.bf16.msra.mxu0 0
      %299 = vmatprep.subr.bf16.mxu0 0
      %300 = vmatpush1.bf16.msra.mxu0 0
      %301 = vmatprep.subr.bf16.mxu0 0
      %302 = vmatpush1.bf16.msra.mxu0 0
      %303 = vmatprep.subr.bf16.mxu0 0
      %304 = vmatpush1.bf16.msra.mxu0 0
      %305 = vmatprep.subr.bf16.mxu0 0
      %306 = vmatpush1.bf16.msra.mxu0 0
      %307 = vmatprep.subr.bf16.mxu0 0
      %308 = vmatpush1.bf16.msra.mxu0 0
      %309 = vmatprep.subr.bf16.mxu0 0
      %310 = vmatpush1.bf16.msra.mxu0 0
      %311 = vmatprep.subr.bf16.mxu0 0
      %312 = vmatpush1.bf16.msra.mxu0 0
      %313 = vmatprep.subr.bf16.mxu0 0
      %314 = vmatpush1.bf16.msra.mxu0 0
      %315 = vmatprep.subr.bf16.mxu0 0
      %316 = vmatpush1.bf16.msra.mxu0 0
      %317 = vmatprep.mubr.bf16.mxu0 0
      %318 = vmatmul.mubr.bf16.gmra.mrb[0].mxu0 %v279
      %v319 = vpop.f32.mrb[0].mxu0
      %v320 = vadd.f32 0.0, %v319
      %v321 = vpop.f32.mrb[0].mxu0
      %v322 = vpop.f32.mrb[0].mxu0
      %v323 = vpop.f32.mrb[0].mxu0
      %324 = vdwg.mxu0
      %v327 = vunpack.c.l.b16 %v265
      %v328 = vunpack.c.l.b16 %v266
      %v329 = vpack.c.b16 %v328, %v327
      %v331 = vsel %vm277, %v269, 0
      %v334 = vsel %vm281, %v329, 0
      %336 = vmatprep.subr.bf16.mxu0 0
      %337 = vmatpush1.bf16.msra.mxu0 %v334
      %338 = vmatprep.subr.bf16.mxu0 0
      %339 = vmatpush1.bf16.msra.mxu0 0
      %340 = vmatprep.subr.bf16.mxu0 0
      %341 = vmatpush1.bf16.msra.mxu0 0
      %342 = vmatprep.subr.bf16.mxu0 0
      %343 = vmatpush1.bf16.msra.mxu0 0
      %344 = vmatprep.subr.bf16.mxu0 0
      %345 = vmatpush1.bf16.msra.mxu0 0
      %346 = vmatprep.subr.bf16.mxu0 0
      %347 = vmatpush1.bf16.msra.mxu0 0
      %348 = vmatprep.subr.bf16.mxu0 0
      %349 = vmatpush1.bf16.msra.mxu0 0
      %350 = vmatprep.subr.bf16.mxu0 0
      %351 = vmatpush1.bf16.msra.mxu0 0
      %352 = vmatprep.subr.bf16.mxu0 0
      %353 = vmatpush1.bf16.msra.mxu0 0
      %354 = vmatprep.subr.bf16.mxu0 0
      %355 = vmatpush1.bf16.msra.mxu0 0
      %356 = vmatprep.subr.bf16.mxu0 0
      %357 = vmatpush1.bf16.msra.mxu0 0
      %358 = vmatprep.subr.bf16.mxu0 0
      %359 = vmatpush1.bf16.msra.mxu0 0
      %360 = vmatprep.subr.bf16.mxu0 0
      %361 = vmatpush1.bf16.msra.mxu0 0
      %362 = vmatprep.subr.bf16.mxu0 0
      %363 = vmatpush1.bf16.msra.mxu0 0
      %364 = vmatprep.subr.bf16.mxu0 0
      %365 = vmatpush1.bf16.msra.mxu0 0
      %366 = vmatprep.subr.bf16.mxu0 0
      %367 = vmatpush1.bf16.msra.mxu0 0
      %368 = vmatprep.mubr.bf16.mxu0 0
      %369 = vmatmul.mubr.bf16.gmra.mrb[0].mxu0 %v331
      %v370 = vpop.f32.mrb[0].mxu0
      %v371 = vadd.f32 %v320, %v370
      %v372 = vpop.f32.mrb[0].mxu0
      %v373 = vpop.f32.mrb[0].mxu0
      %v374 = vpop.f32.mrb[0].mxu0
      %375 = vdwg.mxu0
      %s376 = scalar_lea.vmem %s2, 8
      %v377 = vld [vmem:[%s376] sm:$0xf]
      %378 = vrot.lane.b32.xlu0 %v329, 120
      %v379 = vpop.permute.xlu0 %378
      %v381 = vsel %vm277, %v377, 0
      %v384 = vsel %vm281, %v379, 0
      %386 = vmatprep.subr.bf16.mxu0 0
      %387 = vmatpush1.bf16.msra.mxu0 %v384
      %388 = vmatprep.subr.bf16.mxu0 0
      %389 = vmatpush1.bf16.msra.mxu0 0
      %390 = vmatprep.subr.bf16.mxu0 0
      %391 = vmatpush1.bf16.msra.mxu0 0
      %392 = vmatprep.subr.bf16.mxu0 0
      %393 = vmatpush1.bf16.msra.mxu0 0
      %394 = vmatprep.subr.bf16.mxu0 0
      %395 = vmatpush1.bf16.msra.mxu0 0
      %396 = vmatprep.subr.bf16.mxu0 0
      %397 = vmatpush1.bf16.msra.mxu0 0
      %398 = vmatprep.subr.bf16.mxu0 0
      %399 = vmatpush1.bf16.msra.mxu0 0
      %400 = vmatprep.subr.bf16.mxu0 0
      %401 = vmatpush1.bf16.msra.mxu0 0
      %402 = vmatprep.subr.bf16.mxu0 0
      %403 = vmatpush1.bf16.msra.mxu0 0
      %404 = vmatprep.subr.bf16.mxu0 0
      %405 = vmatpush1.bf16.msra.mxu0 0
      %406 = vmatprep.subr.bf16.mxu0 0
      %407 = vmatpush1.bf16.msra.mxu0 0
      %408 = vmatprep.subr.bf16.mxu0 0
      %409 = vmatpush1.bf16.msra.mxu0 0
      %410 = vmatprep.subr.bf16.mxu0 0
      %411 = vmatpush1.bf16.msra.mxu0 0
      %412 = vmatprep.subr.bf16.mxu0 0
      %413 = vmatpush1.bf16.msra.mxu0 0
      %414 = vmatprep.subr.bf16.mxu0 0
      %415 = vmatpush1.bf16.msra.mxu0 0
      %416 = vmatprep.subr.bf16.mxu0 0
      %417 = vmatpush1.bf16.msra.mxu0 0
      %418 = vmatprep.mubr.bf16.mxu0 0
      %419 = vmatmul.mubr.bf16.gmra.mrb[0].mxu0 %v381
      %v420 = vpop.f32.mrb[0].mxu0
      %v421 = vadd.f32 0.0, %v420
      %v422 = vpop.f32.mrb[0].mxu0
      %v423 = vpop.f32.mrb[0].mxu0
      %v424 = vpop.f32.mrb[0].mxu0
      %425 = vdwg.mxu0
      %v426 = vadd.f32 %v371, %v421
      %vm427 = vcmask 523264
      %v428 = vsel %vm427, %v426, 0.0
      %429 = vadd.xlane.f32.xlu0 %v428
      %v430 = vpop.xlane.xlu0 %429
      %v431 = vmul.f32 %v430, 0.015625
      %v432 = vsub.f32 %v426, %v431
      %v433 = vmul.f32 %v432, %v432
      %v434 = vsel %vm427, %v433, 0.0
      %435 = vadd.xlane.f32.xlu0 %v434
      %v436 = vpop.xlane.xlu0 %435
      %vm437 = vcmask 7168
      %438 = vst.msk [vmem:[%s259] sm:$0xff] %vm437, %v430
      %439 = vst.msk [vmem:[%s263] sm:$0xff] %vm437, %v436
      %v440 = vpack.c.bf16 %v426, %v426
      %vm441 = vcmask 519168
      %442 = vst.msk [vmem:[%s255] sm:$0xf] %vm441, %v440
      %p443 = scmp.lt.s32.totalorder %s17, 1
      %s444 = scalar_select %p443, %s17, 1
      %s445 = smul.addr %s444, 4
      %s446 = scalar_lea.vmem %s3, %s445
      %p447 = scmp.lt.s32.totalorder %s17, 1
      %s448 = scalar_select %p447, %s17, 1
      %s449 = smul.addr %s448, 8
      %s450 = scalar_lea.vmem %s4, %s449
      %p451 = scmp.lt.s32.totalorder %s17, 1
      %s452 = scalar_select %p451, %s17, 1
      %s453 = smul.addr %s452, 8
      %s454 = scalar_lea.vmem %s5, %s453
      // Predicated region
      $region33: #{down_conv.2} parent=31 // pred_check
        %p455 = pneg %p108
      $region34: #{down_conv.2} parent=31 // pred_check_branch
        %457 = sbr.rel (%p455) target = $region36
      $region35: #{down_conv.2} parent=31 // pred_region
        _
      $region36: #{down_conv.2} parent=31 // pred_fallthru
        _
      // Predicated region
      $region37: #{down_conv.2} parent=31 // pred_check
        %p458 = pneg %p134
      $region38: #{down_conv.2} parent=31 // pred_check_branch
        %460 = sbr.rel (%p458) target = $region40
      $region39: #{down_conv.2} parent=31 // pred_region
        _
      $region40: #{down_conv.2} parent=31 // pred_fallthru
        _
      // Predicated region
      $region41: #{down_conv.2} parent=31 // pred_check
        %p461 = pneg %p160
      $region42: #{down_conv.2} parent=31 // pred_check_branch
        %463 = sbr.rel (%p461) target = $region44
      $region43: #{down_conv.2} parent=31 // pred_region
        _
      $region44: #{down_conv.2} parent=31 // pred_fallthru
        _
    $region32: #{down_conv.2} parent=5 // pred_fallthru
      _
    %p464 = scmp.le.s32.totalorder 2, %s12
    // Predicated region
    $region45: #{down_conv.2} parent=5 // pred_check
      %p465 = pneg %p464
    $region46: #{down_conv.2} parent=5 // pred_check_branch
      %467 = sbr.rel (%p465) target = $region48
    $region47: #{down_conv.2} parent=5 // pred_region
      %s468 = ssub.s32 %s12, 2
      // Predicated region
      $region49: #{down_conv.2} parent=47 // pred_check
        %p469 = pneg %p114
      $region50: #{down_conv.2} parent=47 // pred_check_branch
        %471 = sbr.rel (%p469) target = $region52
      $region51: #{down_conv.2} parent=47 // pred_region
        %p472 = scmp.lt.s32.totalorder %s18, 1
        %s473 = scalar_select %p472, %s18, 1
        %s474 = smul.addr %s473, 4
        %s475 = scalar_lea.vmem %s3, %s474
      $region52: #{down_conv.2} parent=47 // pred_fallthru
        _
      // Predicated region
      $region53: #{down_conv.2} parent=47 // pred_check
        %p476 = pneg %p140
      $region54: #{down_conv.2} parent=47 // pred_check_branch
        %478 = sbr.rel (%p476) target = $region56
      $region55: #{down_conv.2} parent=47 // pred_region
        %p479 = scmp.lt.s32.totalorder %s18, 1
        %s480 = scalar_select %p479, %s18, 1
        %s481 = smul.addr %s480, 8
        %s482 = scalar_lea.vmem %s4, %s481
      $region56: #{down_conv.2} parent=47 // pred_fallthru
        _
      // Predicated region
      $region57: #{down_conv.2} parent=47 // pred_check
        %p483 = pneg %p166
      $region58: #{down_conv.2} parent=47 // pred_check_branch
        %485 = sbr.rel (%p483) target = $region60
      $region59: #{down_conv.2} parent=47 // pred_region
        %p486 = scmp.lt.s32.totalorder %s18, 1
        %s487 = scalar_select %p486, %s18, 1
        %s488 = smul.addr %s487, 8
        %s489 = scalar_lea.vmem %s5, %s488
      $region60: #{down_conv.2} parent=47 // pred_fallthru
        _
    $region48: #{down_conv.2} parent=5 // pred_fallthru
      _
  $region6: #{down_conv.2} parent=0 // loop_footer
    %s16 = sadd.s32 1, %s12
  $region7: #{down_conv.2} parent=0 // loop_footer_branch
    %11 = sbr.rel target = $region3
  $region8: #{down_conv.2} parent=0 // loop_exit
    _

</llo_original>
